<compile_context>
chip_gen: v6e
topology: v6e:2x2x1
jax: 0.10.0
libtpu: 0.0.40
codegen_flags: <defaults>
</compile_context>

<pallas_src>
import functools

import jax
import jax.numpy as jnp
from jax import lax
from jax.experimental import pallas as pl
from jax.experimental.pallas import tpu as pltpu


def _conv_relu_kernel(x_ref, halo_ref, w_ref, b_ref, o_ref, *, K, TL):
    """Fused Conv1d (VALID, stride 1) + bias + ReLU for one (NB, TL) tile.

    x_ref:    (NB, Cin, WX)     WX == TL + K - 1 (single-tile path, full row)
                                or WX == TL      (tiled path; halo adds K-1 cols)
    halo_ref: (NB, 1, Cin, hw)  next tile's leading K-1 columns (tiled path only)
    w_ref:    (K, Cout, Cin)    tap-major weights
    b_ref:    (Cout, 1)
    o_ref:    (NB, Cout, TL)    lane-dense output tile
    """
    NB, _, WX = x_ref.shape
    W = TL + K - 1                               # window width needed per tile

    bias = b_ref[...]                            # (Cout, 1) lane-broadcast
    for b in range(NB):                          # NB == 1 on the tiled (large-L) path
        if WX == W:
            win = x_ref[b]                       # (Cin, W): block already holds the window
        else:
            # Append the K-1 halo columns (lane offset TL is 128-aligned).
            win = jnp.concatenate([x_ref[b], halo_ref[b, 0]], axis=-1)   # (Cin, W)

        # K shifted dots, accumulated in f32 on the MXU.
        acc = jnp.dot(w_ref[0], win[:, :TL], preferred_element_type=jnp.float32)
        for k in range(1, K):
            acc += jnp.dot(w_ref[k], win[:, k:k + TL],
                           preferred_element_type=jnp.float32)

        acc += bias                              # (Cout, TL)
        o_ref[b] = jnp.maximum(acc, 0.0).astype(o_ref.dtype)


def conv_block_forward(x, weight, bias, *, length_tile=2048, interpret=False):
    """Equivalent of PyTorch conv_block.forward: relu(conv1d(x)).

    x:      (N, Cin, L)        PyTorch NCL layout (used natively)
    weight: (Cout, Cin, K)     PyTorch Conv1d weight layout
    bias:   (Cout,)
    returns (N, Cout, L_out) with L_out = L - K + 1 (stride=1, no padding)
    """
    N, Cin, L = x.shape
    Cout, Cin_w, K = weight.shape
    assert Cin_w == Cin
    L_out = L - K + 1
    assert L_out >= 1

    itemsize = jnp.dtype(x.dtype).itemsize

    # Clamp the length tile so double-buffered in+out tiles stay far below every
    # generation's scoped VMEM (v7x has only 64 MiB physical).
    vmem_tile_budget = 12 * 1024 * 1024
    max_tl = max(128, (vmem_tile_budget // (2 * (Cin + Cout) * itemsize)) // 128 * 128)
    tl_cap = min(length_tile, max_tl)

    hw = max(K - 1, 1)
    if L_out <= tl_cap:
        # Single length tile covering the whole row (block == full dim is legal).
        TL, WX, num_lt = L_out, L, 1
        # Batch rows per step so ~128 output lanes are filled per grid step.
        NB = min(N, max(1, 128 // max(L_out, 1)))
        halo = jnp.zeros((N, 1, Cin, hw), x.dtype)          # unused on this path
    else:
        # Tiled path: 128-multiple x/out tiles + a tiny halo side-array that
        # carries the next tile's first K-1 columns (keeps all specs Blocked).
        TL, WX, NB = tl_cap, tl_cap, 1
        num_lt = pl.cdiv(L_out, TL)
        if K > 1:
            col = (jnp.arange(1, num_lt + 1, dtype=jnp.int32)[:, None] * TL
                   + jnp.arange(K - 1, dtype=jnp.int32)[None, :])        # (num_lt, K-1)
            col = jnp.clip(col, 0, L - 1)       # clipped cols only feed masked outputs
            halo = jnp.take(x, col.reshape(-1), axis=2)                  # (N, Cin, num_lt*(K-1))
            halo = halo.reshape(N, Cin, num_lt, K - 1).transpose(0, 2, 1, 3)
        else:
            halo = jnp.zeros((N, num_lt, Cin, hw), x.dtype)

    # Tiny re-layouts (weights/bias only); x and the output stay NCL in HBM.
    w_koc = jnp.transpose(weight, (2, 0, 1))     # (K, Cout, Cin)
    b2 = bias.reshape(Cout, 1)

    kernel = functools.partial(_conv_relu_kernel, K=K, TL=TL)
    grid = (pl.cdiv(N, NB), num_lt)

    cost = pl.CostEstimate(
        flops=int(2 * N * Cout * Cin * K * L_out),
        transcendentals=0,
        bytes_accessed=int(x.size * itemsize + halo.size * itemsize
                           + weight.size * jnp.dtype(weight.dtype).itemsize
                           + bias.size * jnp.dtype(bias.dtype).itemsize
                           + N * Cout * L_out * itemsize),
    )

    # TODO(synk): if profiles show exposed DMA at tile boundaries, sweep
    # pipeline_mode=pl.Buffered(3) on the x BlockSpec; bf16 I/O (cast at the
    # HBM boundary) is a further ~2x for bandwidth-bound large-L cases.
    return pl.pallas_call(
        kernel,
        out_shape=jax.ShapeDtypeStruct((N, Cout, L_out), x.dtype),
        grid=grid,
        in_specs=[
            pl.BlockSpec((NB, Cin, WX), lambda nb, lt: (nb, 0, lt)),
            pl.BlockSpec((NB, 1, Cin, hw), lambda nb, lt: (nb, lt, 0, 0)),
            pl.BlockSpec((K, Cout, Cin), lambda nb, lt: (0, 0, 0)),
            pl.BlockSpec((Cout, 1), lambda nb, lt: (0, 0)),
        ],
        out_specs=pl.BlockSpec((NB, Cout, TL), lambda nb, lt: (nb, 0, lt)),
        compiler_params=pltpu.CompilerParams(
            dimension_semantics=("parallel", "parallel"),
            vmem_limit_bytes=32 * 1024 * 1024,
        ),
        cost_estimate=cost,
        interpret=interpret,
    )(x, halo, w_koc, b2)


if __name__ == "__main__":
    key = jax.random.PRNGKey(0)

    def torch_like_init(k, cout, cin, ksz):
        kw, kb = jax.random.split(k)
        bound = 1.0 / (cin * ksz) ** 0.5
        w = jax.random.uniform(kw, (cout, cin, ksz), jnp.float32, -bound, bound)
        b = jax.random.uniform(kb, (cout,), jnp.float32, -bound, bound)
        return w, b

    def reference(x, w, b):
        y = lax.conv_general_dilated(
            x, w, window_strides=(1,), padding="VALID",
            dimension_numbers=("NCH", "OIH", "NCH"),
            precision=lax.Precision.HIGHEST)
        return jnp.maximum(y + b[None, :, None], 0.0)

    # --- required small case: conv_block(4, 8, kernel_size=3) on (2, 4, 16) ---
    k0, k1, key = jax.random.split(key, 3)
    x_small = jax.random.normal(k0, (2, 4, 16), jnp.float32)
    w_small, b_small = torch_like_init(k1, 8, 4, 3)
    out = conv_block_forward(x_small, w_small, b_small)
    out = jax.block_until_ready(out)
    assert out.shape == (2, 8, 14)
    assert jnp.allclose(out, reference(x_small, w_small, b_small),
                        atol=1e-4, rtol=1e-4)

    # --- larger case exercising the length-tiled (halo) path ------------------
    k2, k3, key = jax.random.split(key, 3)
    x_big = jax.random.normal(k2, (3, 4, 4500), jnp.float32)
    w_big, b_big = torch_like_init(k3, 8, 4, 4)
    out_big = conv_block_forward(x_big, w_big, b_big, length_tile=2048)
    out_big = jax.block_until_ready(out_big)
    assert out_big.shape == (3, 8, 4497)
    assert jnp.allclose(out_big, reference(x_big, w_big, b_big),
                        atol=1e-4, rtol=1e-4)

    print("KERNEL_OK")
</pallas_src>

<mosaic_0001>
module attributes {stable_mosaic.version = 11 : i64} {
  func.func @_conv_relu_kernel(%arg0: i32, %arg1: i32, %arg2: memref<2x4x16xf32, #tpu.memory_space<vmem>>, %arg3: memref<2x1x4x2xf32, #tpu.memory_space<vmem>>, %arg4: memref<3x8x4xf32, #tpu.memory_space<vmem>>, %arg5: memref<8x1xf32, #tpu.memory_space<vmem>>, %arg6: memref<2x8x14xf32, #tpu.memory_space<vmem>>) attributes {dimension_semantics = [#tpu.dimension_semantics<parallel>, #tpu.dimension_semantics<parallel>], iteration_bounds = array<i64: 1, 1>, scalar_prefetch = 0 : i64, scratch_operands = 0 : i64, tpu.core_type = #tpu.core_type<tc>, window_params = [{transform_indices = @transform_0, window_bounds = array<i64: 2, 4, 16>}, {transform_indices = @transform_1, window_bounds = array<i64: 2, 1, 4, 2>}, {pipeline_mode = #tpu.pipeline_mode<synchronous>, transform_indices = @transform_2, window_bounds = array<i64: 3, 8, 4>}, {pipeline_mode = #tpu.pipeline_mode<synchronous>, transform_indices = @transform_3, window_bounds = array<i64: 8, 1>}, {transform_indices = @transform_4, window_bounds = array<i64: 2, 8, 14>}]} {
    %c0 = arith.constant 0 : index
    %c0_0 = arith.constant 0 : index
    %0 = vector.load %arg5[%c0, %c0_0] : memref<8x1xf32, #tpu.memory_space<vmem>>, vector<8x1xf32>
    %c0_1 = arith.constant 0 : index
    %c0_2 = arith.constant 0 : index
    %c0_3 = arith.constant 0 : index
    %1 = vector.load %arg2[%c0_1, %c0_2, %c0_3] : memref<2x4x16xf32, #tpu.memory_space<vmem>>, vector<1x4x16xf32>
    %2 = vector.shape_cast %1 : vector<1x4x16xf32> to vector<4x16xf32>
    %c0_4 = arith.constant 0 : index
    %c0_5 = arith.constant 0 : index
    %c0_6 = arith.constant 0 : index
    %3 = vector.load %arg4[%c0_4, %c0_5, %c0_6] : memref<3x8x4xf32, #tpu.memory_space<vmem>>, vector<1x8x4xf32>
    %4 = vector.shape_cast %3 : vector<1x8x4xf32> to vector<8x4xf32>
    %5 = vector.extract_strided_slice %2 {offsets = [0, 0], sizes = [4, 14], strides = [1, 1]} : vector<4x16xf32> to vector<4x14xf32>
    %cst = arith.constant dense<0.000000e+00> : vector<8x14xf32>
    %6 = tpu.matmul %4, %5, %cst {dimension_numbers = #tpu.dot_dimension_numbers<[1], [0], [0], [1], [0, 0, 1, 1], [], []>} : vector<8x4xf32>, vector<4x14xf32>, vector<8x14xf32> -> vector<8x14xf32>
    %c1 = arith.constant 1 : index
    %c0_7 = arith.constant 0 : index
    %c0_8 = arith.constant 0 : index
    %7 = vector.load %arg4[%c1, %c0_7, %c0_8] : memref<3x8x4xf32, #tpu.memory_space<vmem>>, vector<1x8x4xf32>
    %8 = vector.shape_cast %7 : vector<1x8x4xf32> to vector<8x4xf32>
    %9 = vector.extract_strided_slice %2 {offsets = [0, 1], sizes = [4, 14], strides = [1, 1]} : vector<4x16xf32> to vector<4x14xf32>
    %cst_9 = arith.constant dense<0.000000e+00> : vector<8x14xf32>
    %10 = tpu.matmul %8, %9, %cst_9 {dimension_numbers = #tpu.dot_dimension_numbers<[1], [0], [0], [1], [0, 0, 1, 1], [], []>} : vector<8x4xf32>, vector<4x14xf32>, vector<8x14xf32> -> vector<8x14xf32>
    %11 = arith.addf %6, %10 : vector<8x14xf32>
    %c2 = arith.constant 2 : index
    %c0_10 = arith.constant 0 : index
    %c0_11 = arith.constant 0 : index
    %12 = vector.load %arg4[%c2, %c0_10, %c0_11] : memref<3x8x4xf32, #tpu.memory_space<vmem>>, vector<1x8x4xf32>
    %13 = vector.shape_cast %12 : vector<1x8x4xf32> to vector<8x4xf32>
    %14 = vector.extract_strided_slice %2 {offsets = [0, 2], sizes = [4, 14], strides = [1, 1]} : vector<4x16xf32> to vector<4x14xf32>
    %cst_12 = arith.constant dense<0.000000e+00> : vector<8x14xf32>
    %15 = tpu.matmul %13, %14, %cst_12 {dimension_numbers = #tpu.dot_dimension_numbers<[1], [0], [0], [1], [0, 0, 1, 1], [], []>} : vector<8x4xf32>, vector<4x14xf32>, vector<8x14xf32> -> vector<8x14xf32>
    %16 = arith.addf %11, %15 : vector<8x14xf32>
    %17 = vector.broadcast %0 : vector<8x1xf32> to vector<8x14xf32>
    %18 = arith.addf %16, %17 : vector<8x14xf32>
    %cst_13 = arith.constant 0.000000e+00 : f32
    %19 = vector.broadcast %cst_13 : f32 to vector<8x14xf32>
    %20 = arith.maximumf %18, %19 : vector<8x14xf32>
    %c0_14 = arith.constant 0 : index
    %c0_15 = arith.constant 0 : index
    %c0_16 = arith.constant 0 : index
    %21 = vector.load %arg6[%c0_14, %c0_15, %c0_16] : memref<2x8x14xf32, #tpu.memory_space<vmem>>, vector<1x8x14xf32>
    %22 = vector.shape_cast %21 : vector<1x8x14xf32> to vector<8x14xf32>
    %23 = vector.shape_cast %20 : vector<8x14xf32> to vector<1x8x14xf32>
    tpu.vector_store %arg6[%c0_14, %c0_15, %c0_16], %23 {strides = array<i32>} : memref<2x8x14xf32, #tpu.memory_space<vmem>>, vector<1x8x14xf32>,
    %c1_17 = arith.constant 1 : index
    %c0_18 = arith.constant 0 : index
    %c0_19 = arith.constant 0 : index
    %24 = vector.load %arg2[%c1_17, %c0_18, %c0_19] : memref<2x4x16xf32, #tpu.memory_space<vmem>>, vector<1x4x16xf32>
    %25 = vector.shape_cast %24 : vector<1x4x16xf32> to vector<4x16xf32>
    %c0_20 = arith.constant 0 : index
    %c0_21 = arith.constant 0 : index
    %c0_22 = arith.constant 0 : index
    %26 = vector.load %arg4[%c0_20, %c0_21, %c0_22] : memref<3x8x4xf32, #tpu.memory_space<vmem>>, vector<1x8x4xf32>
    %27 = vector.shape_cast %26 : vector<1x8x4xf32> to vector<8x4xf32>
    %28 = vector.extract_strided_slice %25 {offsets = [0, 0], sizes = [4, 14], strides = [1, 1]} : vector<4x16xf32> to vector<4x14xf32>
    %cst_23 = arith.constant dense<0.000000e+00> : vector<8x14xf32>
    %29 = tpu.matmul %27, %28, %cst_23 {dimension_numbers = #tpu.dot_dimension_numbers<[1], [0], [0], [1], [0, 0, 1, 1], [], []>} : vector<8x4xf32>, vector<4x14xf32>, vector<8x14xf32> -> vector<8x14xf32>
    %c1_24 = arith.constant 1 : index
    %c0_25 = arith.constant 0 : index
    %c0_26 = arith.constant 0 : index
    %30 = vector.load %arg4[%c1_24, %c0_25, %c0_26] : memref<3x8x4xf32, #tpu.memory_space<vmem>>, vector<1x8x4xf32>
    %31 = vector.shape_cast %30 : vector<1x8x4xf32> to vector<8x4xf32>
    %32 = vector.extract_strided_slice %25 {offsets = [0, 1], sizes = [4, 14], strides = [1, 1]} : vector<4x16xf32> to vector<4x14xf32>
    %cst_27 = arith.constant dense<0.000000e+00> : vector<8x14xf32>
    %33 = tpu.matmul %31, %32, %cst_27 {dimension_numbers = #tpu.dot_dimension_numbers<[1], [0], [0], [1], [0, 0, 1, 1], [], []>} : vector<8x4xf32>, vector<4x14xf32>, vector<8x14xf32> -> vector<8x14xf32>
    %34 = arith.addf %29, %33 : vector<8x14xf32>
    %c2_28 = arith.constant 2 : index
    %c0_29 = arith.constant 0 : index
    %c0_30 = arith.constant 0 : index
    %35 = vector.load %arg4[%c2_28, %c0_29, %c0_30] : memref<3x8x4xf32, #tpu.memory_space<vmem>>, vector<1x8x4xf32>
    %36 = vector.shape_cast %35 : vector<1x8x4xf32> to vector<8x4xf32>
    %37 = vector.extract_strided_slice %25 {offsets = [0, 2], sizes = [4, 14], strides = [1, 1]} : vector<4x16xf32> to vector<4x14xf32>
    %cst_31 = arith.constant dense<0.000000e+00> : vector<8x14xf32>
    %38 = tpu.matmul %36, %37, %cst_31 {dimension_numbers = #tpu.dot_dimension_numbers<[1], [0], [0], [1], [0, 0, 1, 1], [], []>} : vector<8x4xf32>, vector<4x14xf32>, vector<8x14xf32> -> vector<8x14xf32>
    %39 = arith.addf %34, %38 : vector<8x14xf32>
    %40 = vector.broadcast %0 : vector<8x1xf32> to vector<8x14xf32>
    %41 = arith.addf %39, %40 : vector<8x14xf32>
    %cst_32 = arith.constant 0.000000e+00 : f32
    %42 = vector.broadcast %cst_32 : f32 to vector<8x14xf32>
    %43 = arith.maximumf %41, %42 : vector<8x14xf32>
    %c1_33 = arith.constant 1 : index
    %c0_34 = arith.constant 0 : index
    %c0_35 = arith.constant 0 : index
    %44 = vector.load %arg6[%c1_33, %c0_34, %c0_35] : memref<2x8x14xf32, #tpu.memory_space<vmem>>, vector<1x8x14xf32>
    %45 = vector.shape_cast %44 : vector<1x8x14xf32> to vector<8x14xf32>
    %46 = vector.shape_cast %43 : vector<8x14xf32> to vector<1x8x14xf32>
    tpu.vector_store %arg6[%c1_33, %c0_34, %c0_35], %46 {strides = array<i32>} : memref<2x8x14xf32, #tpu.memory_space<vmem>>, vector<1x8x14xf32>,
    return
  }
  func.func @transform_0(%arg0: i32, %arg1: i32) -> (i32, i32, i32) {
    %c0_i32 = arith.constant 0 : i32
    %c0_i32_0 = arith.constant 0 : i32
    return %arg0, %c0_i32, %arg1 : i32, i32, i32
  }
  func.func @transform_1(%arg0: i32, %arg1: i32) -> (i32, i32, i32, i32) {
    %c0_i32 = arith.constant 0 : i32
    %c0_i32_0 = arith.constant 0 : i32
    %c0_i32_1 = arith.constant 0 : i32
    return %arg0, %arg1, %c0_i32, %c0_i32_0 : i32, i32, i32, i32
  }
  func.func @transform_2(%arg0: i32, %arg1: i32) -> (i32, i32, i32) {
    %c0_i32 = arith.constant 0 : i32
    %c0_i32_0 = arith.constant 0 : i32
    %c0_i32_1 = arith.constant 0 : i32
    %c0_i32_2 = arith.constant 0 : i32
    return %c0_i32, %c0_i32_0, %c0_i32_1 : i32, i32, i32
  }
  func.func @transform_3(%arg0: i32, %arg1: i32) -> (i32, i32) {
    %c0_i32 = arith.constant 0 : i32
    %c0_i32_0 = arith.constant 0 : i32
    %c0_i32_1 = arith.constant 0 : i32
    return %c0_i32, %c0_i32_0 : i32, i32
  }
  func.func @transform_4(%arg0: i32, %arg1: i32) -> (i32, i32, i32) {
    %c0_i32 = arith.constant 0 : i32
    %c0_i32_0 = arith.constant 0 : i32
    return %arg0, %c0_i32, %arg1 : i32, i32, i32
  }
}

</mosaic_0001>

<llo_original>
// kernel: tpu_custom_call.1
$region0: #{tpu_custom_call.1}
  #allocation0 [shape = 'u32[]', space=smem, size = 0x4, offset = 0x4, fixed_abs, tag = 'smem constant byte address 0x4 - core index']
  #allocation1 [shape = 'u32[144,128]{1,0:T(1,128)}', space=vmem, size = 0x12000, scoped, tag = 'internal scratch']
  %s0 = inlined_call_operand.vmem [shape: f32[2,4,16], index: 0, kind: input, shape index: {}]
  %s1 = inlined_call_operand.vmem [shape: f32[2,1,4,2], index: 1, kind: input, shape index: {}]
  %s2 = inlined_call_operand.vmem [shape: f32[3,8,4], index: 2, kind: input, shape index: {}]
  %s3 = inlined_call_operand.vmem [shape: f32[8,1], index: 3, kind: input, shape index: {}]
  %s4 = inlined_call_operand.hbm [shape: f32[2,8,14], index: 4, kind: output, shape index: {}]
  %s5 = sld [smem:[#allocation0]]
  $region26: #{tpu_custom_call.1} parent=0
    _
  %s7 = ssub.s32 1, %s5
  %s8 = scalar_select 0, %s7, %s5
  $region1: #{tpu_custom_call.1} parent=0
    #allocation2 [shape = 'u8[8192]{0}', space=vmem, size = 0x2000, scoped, tag = 'output window, operand 0, single buffered']
    #allocation3 [shape = 's32[1]{0}', space=sflag, size = 0x4, scoped, tag = 'scoped memory for tpu_custom_call.1']
    %9 = vsyncpa [#allocation3], 0
    // Predicated region
    $region2: #{tpu_custom_call.1} parent=1 // pred_check
      _
    $region3: #{tpu_custom_call.1} parent=1 // pred_check_branch
      %11 = sbr.rel (0) target = $region5
    $region4: #{tpu_custom_call.1} parent=1 // pred_region
      _
    $region5: #{tpu_custom_call.1} parent=1 // pred_fallthru
      _
    // Predicated region
    $region6: #{tpu_custom_call.1} parent=1 // pred_check
      _
    $region7: #{tpu_custom_call.1} parent=1 // pred_check_branch
      %13 = sbr.rel (0) target = $region9
    $region8: #{tpu_custom_call.1} parent=1 // pred_region
      _
    $region9: #{tpu_custom_call.1} parent=1 // pred_fallthru
      _
    // Predicated region
    $region10: #{tpu_custom_call.1} parent=1 // pred_check
      _
    $region11: #{tpu_custom_call.1} parent=1 // pred_check_branch
      %15 = sbr.rel (0) target = $region13
    $region12: #{tpu_custom_call.1} parent=1 // pred_region
      _
    $region13: #{tpu_custom_call.1} parent=1 // pred_fallthru
      _
    // Predicated region
    $region14: #{tpu_custom_call.1} parent=1 // pred_check
      _
    $region15: #{tpu_custom_call.1} parent=1 // pred_check_branch
      %17 = sbr.rel (0) target = $region17
    $region16: #{tpu_custom_call.1} parent=1 // pred_region
      _
    $region17: #{tpu_custom_call.1} parent=1 // pred_fallthru
      _
    %v18 = vld [vmem:[%s3] sm:$0xff]
    %v19 = vld [vmem:[%s0] sm:$0xf]
    %v20 = vld [vmem:[%s2] sm:$0xff]
    %s21 = scalar_lea.vmem %s2, 8
    %v22 = vld [vmem:[%s21] sm:$0xff]
    %24 = vrot.lane.b32.xlu0 %v19, 127
    %v25 = vpop.permute.xlu0 %24
    %vm26 = vcmask 31744
    %v28 = vsel %vm26, %v22, 0
    %vm30 = vcmask 1043456
    %v31 = vsel %vm30, %v25, 0
    %33 = vmatprep.subr.mxu0 0.0
    %34 = vmatpush1.msra.mxu0 0.0
    %35 = vmatprep.subr.mxu0 0.0
    %36 = vmatpush1.msra.mxu0 0.0
    %37 = vmatprep.subr.mxu0 0.0
    %38 = vmatpush1.msra.mxu0 0.0
    %39 = vmatprep.subr.mxu0 0.0
    %40 = vmatpush1.msra.mxu0 0.0
    %41 = vmatprep.subr.mxu0 0.0
    %42 = vmatpush1.msra.mxu0 0.0
    %43 = vmatprep.subr.mxu0 0.0
    %44 = vmatpush1.msra.mxu0 0.0
    %45 = vmatprep.subr.mxu0 0.0
    %46 = vmatpush1.msra.mxu0 0.0
    %47 = vmatprep.subr.mxu0 0.0
    %48 = vmatpush1.msra.mxu0 0.0
    %49 = vmatprep.subr.mxu0 0.0
    %50 = vmatpush1.msra.mxu0 0.0
    %51 = vmatprep.subr.mxu0 0.0
    %52 = vmatpush1.msra.mxu0 0.0
    %53 = vmatprep.subr.mxu0 0.0
    %54 = vmatpush1.msra.mxu0 0.0
    %55 = vmatprep.subr.mxu0 0.0
    %56 = vmatpush1.msra.mxu0 0.0
    %57 = vmatprep.subr.mxu0 0.0
    %58 = vmatpush1.msra.mxu0 0.0
    %59 = vmatprep.subr.mxu0 0.0
    %60 = vmatpush1.msra.mxu0 0.0
    %61 = vmatprep.subr.mxu0 0.0
    %62 = vmatpush1.msra.mxu0 0.0
    %63 = vmatprep.subr.mxu0 0.0
    %64 = vmatpush1.msra.mxu0 %v31
    %65 = vmatprep.subr.mxu0 0.0
    %66 = vmatpush2.msra.mxu0 0.0
    %67 = vmatprep.subr.mxu0 0.0
    %68 = vmatpush2.msra.mxu0 0.0
    %69 = vmatprep.subr.mxu0 0.0
    %70 = vmatpush2.msra.mxu0 0.0
    %71 = vmatprep.subr.mxu0 0.0
    %72 = vmatpush2.msra.mxu0 0.0
    %73 = vmatprep.subr.mxu0 0.0
    %74 = vmatpush2.msra.mxu0 0.0
    %75 = vmatprep.subr.mxu0 0.0
    %76 = vmatpush2.msra.mxu0 0.0
    %77 = vmatprep.subr.mxu0 0.0
    %78 = vmatpush2.msra.mxu0 0.0
    %79 = vmatprep.subr.mxu0 0.0
    %80 = vmatpush2.msra.mxu0 0.0
    %81 = vmatprep.subr.mxu0 0.0
    %82 = vmatpush2.msra.mxu0 0.0
    %83 = vmatprep.subr.mxu0 0.0
    %84 = vmatpush2.msra.mxu0 0.0
    %85 = vmatprep.subr.mxu0 0.0
    %86 = vmatpush2.msra.mxu0 0.0
    %87 = vmatprep.subr.mxu0 0.0
    %88 = vmatpush2.msra.mxu0 0.0
    %89 = vmatprep.subr.mxu0 0.0
    %90 = vmatpush2.msra.mxu0 0.0
    %91 = vmatprep.subr.mxu0 0.0
    %92 = vmatpush2.msra.mxu0 0.0
    %93 = vmatprep.subr.mxu0 0.0
    %94 = vmatpush2.msra.mxu0 0.0
    %95 = vmatprep.subr.mxu0 0.0
    %96 = vmatpush2.msra.mxu0 0.0
    %97 = vmatprep.mubr.f32.mxu0 0.0
    %98 = vmatmul.mubr.f32.gmra.mxu0 %v28
    %v99 = vpop.f32.mrf.mxu0
    %v100 = vadd.f32 0.0, %v99
    %v101 = vpop.f32.mrf.mxu0
    %102 = vdwg.mxu0
    %v104 = vsel %vm26, %v20, 0
    %v106 = vsel %vm30, %v19, 0
    %108 = vmatprep.subr.mxu0 0.0
    %109 = vmatpush1.msra.mxu0 0.0
    %110 = vmatprep.subr.mxu0 0.0
    %111 = vmatpush1.msra.mxu0 0.0
    %112 = vmatprep.subr.mxu0 0.0
    %113 = vmatpush1.msra.mxu0 0.0
    %114 = vmatprep.subr.mxu0 0.0
    %115 = vmatpush1.msra.mxu0 0.0
    %116 = vmatprep.subr.mxu0 0.0
    %117 = vmatpush1.msra.mxu0 0.0
    %118 = vmatprep.subr.mxu0 0.0
    %119 = vmatpush1.msra.mxu0 0.0
    %120 = vmatprep.subr.mxu0 0.0
    %121 = vmatpush1.msra.mxu0 0.0
    %122 = vmatprep.subr.mxu0 0.0
    %123 = vmatpush1.msra.mxu0 0.0
    %124 = vmatprep.subr.mxu0 0.0
    %125 = vmatpush1.msra.mxu0 0.0
    %126 = vmatprep.subr.mxu0 0.0
    %127 = vmatpush1.msra.mxu0 0.0
    %128 = vmatprep.subr.mxu0 0.0
    %129 = vmatpush1.msra.mxu0 0.0
    %130 = vmatprep.subr.mxu0 0.0
    %131 = vmatpush1.msra.mxu0 0.0
    %132 = vmatprep.subr.mxu0 0.0
    %133 = vmatpush1.msra.mxu0 0.0
    %134 = vmatprep.subr.mxu0 0.0
    %135 = vmatpush1.msra.mxu0 0.0
    %136 = vmatprep.subr.mxu0 0.0
    %137 = vmatpush1.msra.mxu0 0.0
    %138 = vmatprep.subr.mxu0 0.0
    %139 = vmatpush1.msra.mxu0 %v106
    %140 = vmatprep.subr.mxu0 0.0
    %141 = vmatpush2.msra.mxu0 0.0
    %142 = vmatprep.subr.mxu0 0.0
    %143 = vmatpush2.msra.mxu0 0.0
    %144 = vmatprep.subr.mxu0 0.0
    %145 = vmatpush2.msra.mxu0 0.0
    %146 = vmatprep.subr.mxu0 0.0
    %147 = vmatpush2.msra.mxu0 0.0
    %148 = vmatprep.subr.mxu0 0.0
    %149 = vmatpush2.msra.mxu0 0.0
    %150 = vmatprep.subr.mxu0 0.0
    %151 = vmatpush2.msra.mxu0 0.0
    %152 = vmatprep.subr.mxu0 0.0
    %153 = vmatpush2.msra.mxu0 0.0
    %154 = vmatprep.subr.mxu0 0.0
    %155 = vmatpush2.msra.mxu0 0.0
    %156 = vmatprep.subr.mxu0 0.0
    %157 = vmatpush2.msra.mxu0 0.0
    %158 = vmatprep.subr.mxu0 0.0
    %159 = vmatpush2.msra.mxu0 0.0
    %160 = vmatprep.subr.mxu0 0.0
    %161 = vmatpush2.msra.mxu0 0.0
    %162 = vmatprep.subr.mxu0 0.0
    %163 = vmatpush2.msra.mxu0 0.0
    %164 = vmatprep.subr.mxu0 0.0
    %165 = vmatpush2.msra.mxu0 0.0
    %166 = vmatprep.subr.mxu0 0.0
    %167 = vmatpush2.msra.mxu0 0.0
    %168 = vmatprep.subr.mxu0 0.0
    %169 = vmatpush2.msra.mxu0 0.0
    %170 = vmatprep.subr.mxu0 0.0
    %171 = vmatpush2.msra.mxu0 0.0
    %172 = vmatprep.mubr.f32.mxu0 0.0
    %173 = vmatmul.mubr.f32.gmra.mxu0 %v104
    %v174 = vpop.f32.mrf.mxu0
    %v175 = vadd.f32 %v100, %v174
    %v176 = vpop.f32.mrf.mxu0
    %177 = vdwg.mxu0
    %s178 = scalar_lea.vmem %s2, 16
    %v179 = vld [vmem:[%s178] sm:$0xff]
    %180 = vrot.lane.b32.xlu0 %v19, 126
    %v181 = vpop.permute.xlu0 %180
    %v183 = vsel %vm26, %v179, 0
    %v185 = vsel %vm30, %v181, 0
    %187 = vmatprep.subr.mxu0 0.0
    %188 = vmatpush1.msra.mxu0 0.0
    %189 = vmatprep.subr.mxu0 0.0
    %190 = vmatpush1.msra.mxu0 0.0
    %191 = vmatprep.subr.mxu0 0.0
    %192 = vmatpush1.msra.mxu0 0.0
    %193 = vmatprep.subr.mxu0 0.0
    %194 = vmatpush1.msra.mxu0 0.0
    %195 = vmatprep.subr.mxu0 0.0
    %196 = vmatpush1.msra.mxu0 0.0
    %197 = vmatprep.subr.mxu0 0.0
    %198 = vmatpush1.msra.mxu0 0.0
    %199 = vmatprep.subr.mxu0 0.0
    %200 = vmatpush1.msra.mxu0 0.0
    %201 = vmatprep.subr.mxu0 0.0
    %202 = vmatpush1.msra.mxu0 0.0
    %203 = vmatprep.subr.mxu0 0.0
    %204 = vmatpush1.msra.mxu0 0.0
    %205 = vmatprep.subr.mxu0 0.0
    %206 = vmatpush1.msra.mxu0 0.0
    %207 = vmatprep.subr.mxu0 0.0
    %208 = vmatpush1.msra.mxu0 0.0
    %209 = vmatprep.subr.mxu0 0.0
    %210 = vmatpush1.msra.mxu0 0.0
    %211 = vmatprep.subr.mxu0 0.0
    %212 = vmatpush1.msra.mxu0 0.0
    %213 = vmatprep.subr.mxu0 0.0
    %214 = vmatpush1.msra.mxu0 0.0
    %215 = vmatprep.subr.mxu0 0.0
    %216 = vmatpush1.msra.mxu0 0.0
    %217 = vmatprep.subr.mxu0 0.0
    %218 = vmatpush1.msra.mxu0 %v185
    %219 = vmatprep.subr.mxu0 0.0
    %220 = vmatpush2.msra.mxu0 0.0
    %221 = vmatprep.subr.mxu0 0.0
    %222 = vmatpush2.msra.mxu0 0.0
    %223 = vmatprep.subr.mxu0 0.0
    %224 = vmatpush2.msra.mxu0 0.0
    %225 = vmatprep.subr.mxu0 0.0
    %226 = vmatpush2.msra.mxu0 0.0
    %227 = vmatprep.subr.mxu0 0.0
    %228 = vmatpush2.msra.mxu0 0.0
    %229 = vmatprep.subr.mxu0 0.0
    %230 = vmatpush2.msra.mxu0 0.0
    %231 = vmatprep.subr.mxu0 0.0
    %232 = vmatpush2.msra.mxu0 0.0
    %233 = vmatprep.subr.mxu0 0.0
    %234 = vmatpush2.msra.mxu0 0.0
    %235 = vmatprep.subr.mxu0 0.0
    %236 = vmatpush2.msra.mxu0 0.0
    %237 = vmatprep.subr.mxu0 0.0
    %238 = vmatpush2.msra.mxu0 0.0
    %239 = vmatprep.subr.mxu0 0.0
    %240 = vmatpush2.msra.mxu0 0.0
    %241 = vmatprep.subr.mxu0 0.0
    %242 = vmatpush2.msra.mxu0 0.0
    %243 = vmatprep.subr.mxu0 0.0
    %244 = vmatpush2.msra.mxu0 0.0
    %245 = vmatprep.subr.mxu0 0.0
    %246 = vmatpush2.msra.mxu0 0.0
    %247 = vmatprep.subr.mxu0 0.0
    %248 = vmatpush2.msra.mxu0 0.0
    %249 = vmatprep.subr.mxu0 0.0
    %250 = vmatpush2.msra.mxu0 0.0
    %251 = vmatprep.mubr.f32.mxu0 0.0
    %252 = vmatmul.mubr.f32.gmra.mxu0 %v183
    %v253 = vpop.f32.mrf.mxu0
    %v254 = vadd.f32 0.0, %v253
    %v255 = vpop.f32.mrf.mxu0
    %256 = vdwg.mxu0
    %v257 = vadd.f32 %v175, %v254
    %259 = vset.pattern.permute.xlu0 0
    %260 = vperm.xlu0 %259, %v18
    %v261 = vpop.permute.xlu0 %260
    %v263 = vadd.f32 %v257, %v261
    %v264 = vmax.f32 %v263, 0.0
    %vm265 = vcmask 113664
    %266 = vst.msk [vmem:[#allocation2] sm:$0xff] %vm265, %v264
    %s267 = scalar_lea.vmem %s0, 4
    %v268 = vld [vmem:[%s267] sm:$0xf]
    %v269 = vld [vmem:[%s2] sm:$0xff]
    %v270 = vld [vmem:[%s21] sm:$0xff]
    %272 = vrot.lane.b32.xlu0 %v268, 127
    %v273 = vpop.permute.xlu0 %272
    %v275 = vsel %vm26, %v270, 0
    %v277 = vsel %vm30, %v273, 0
    %279 = vmatprep.subr.mxu0 0.0
    %280 = vmatpush1.msra.mxu0 0.0
    %281 = vmatprep.subr.mxu0 0.0
    %282 = vmatpush1.msra.mxu0 0.0
    %283 = vmatprep.subr.mxu0 0.0
    %284 = vmatpush1.msra.mxu0 0.0
    %285 = vmatprep.subr.mxu0 0.0
    %286 = vmatpush1.msra.mxu0 0.0
    %287 = vmatprep.subr.mxu0 0.0
    %288 = vmatpush1.msra.mxu0 0.0
    %289 = vmatprep.subr.mxu0 0.0
    %290 = vmatpush1.msra.mxu0 0.0
    %291 = vmatprep.subr.mxu0 0.0
    %292 = vmatpush1.msra.mxu0 0.0
    %293 = vmatprep.subr.mxu0 0.0
    %294 = vmatpush1.msra.mxu0 0.0
    %295 = vmatprep.subr.mxu0 0.0
    %296 = vmatpush1.msra.mxu0 0.0
    %297 = vmatprep.subr.mxu0 0.0
    %298 = vmatpush1.msra.mxu0 0.0
    %299 = vmatprep.subr.mxu0 0.0
    %300 = vmatpush1.msra.mxu0 0.0
    %301 = vmatprep.subr.mxu0 0.0
    %302 = vmatpush1.msra.mxu0 0.0
    %303 = vmatprep.subr.mxu0 0.0
    %304 = vmatpush1.msra.mxu0 0.0
    %305 = vmatprep.subr.mxu0 0.0
    %306 = vmatpush1.msra.mxu0 0.0
    %307 = vmatprep.subr.mxu0 0.0
    %308 = vmatpush1.msra.mxu0 0.0
    %309 = vmatprep.subr.mxu0 0.0
    %310 = vmatpush1.msra.mxu0 %v277
    %311 = vmatprep.subr.mxu0 0.0
    %312 = vmatpush2.msra.mxu0 0.0
    %313 = vmatprep.subr.mxu0 0.0
    %314 = vmatpush2.msra.mxu0 0.0
    %315 = vmatprep.subr.mxu0 0.0
    %316 = vmatpush2.msra.mxu0 0.0
    %317 = vmatprep.subr.mxu0 0.0
    %318 = vmatpush2.msra.mxu0 0.0
    %319 = vmatprep.subr.mxu0 0.0
    %320 = vmatpush2.msra.mxu0 0.0
    %321 = vmatprep.subr.mxu0 0.0
    %322 = vmatpush2.msra.mxu0 0.0
    %323 = vmatprep.subr.mxu0 0.0
    %324 = vmatpush2.msra.mxu0 0.0
    %325 = vmatprep.subr.mxu0 0.0
    %326 = vmatpush2.msra.mxu0 0.0
    %327 = vmatprep.subr.mxu0 0.0
    %328 = vmatpush2.msra.mxu0 0.0
    %329 = vmatprep.subr.mxu0 0.0
    %330 = vmatpush2.msra.mxu0 0.0
    %331 = vmatprep.subr.mxu0 0.0
    %332 = vmatpush2.msra.mxu0 0.0
    %333 = vmatprep.subr.mxu0 0.0
    %334 = vmatpush2.msra.mxu0 0.0
    %335 = vmatprep.subr.mxu0 0.0
    %336 = vmatpush2.msra.mxu0 0.0
    %337 = vmatprep.subr.mxu0 0.0
    %338 = vmatpush2.msra.mxu0 0.0
    %339 = vmatprep.subr.mxu0 0.0
    %340 = vmatpush2.msra.mxu0 0.0
    %341 = vmatprep.subr.mxu0 0.0
    %342 = vmatpush2.msra.mxu0 0.0
    %343 = vmatprep.mubr.f32.mxu0 0.0
    %344 = vmatmul.mubr.f32.gmra.mxu0 %v275
    %v345 = vpop.f32.mrf.mxu0
    %v346 = vadd.f32 0.0, %v345
    %v347 = vpop.f32.mrf.mxu0
    %348 = vdwg.mxu0
    %v350 = vsel %vm26, %v269, 0
    %v352 = vsel %vm30, %v268, 0
    %354 = vmatprep.subr.mxu0 0.0
    %355 = vmatpush1.msra.mxu0 0.0
    %356 = vmatprep.subr.mxu0 0.0
    %357 = vmatpush1.msra.mxu0 0.0
    %358 = vmatprep.subr.mxu0 0.0
    %359 = vmatpush1.msra.mxu0 0.0
    %360 = vmatprep.subr.mxu0 0.0
    %361 = vmatpush1.msra.mxu0 0.0
    %362 = vmatprep.subr.mxu0 0.0
    %363 = vmatpush1.msra.mxu0 0.0
    %364 = vmatprep.subr.mxu0 0.0
    %365 = vmatpush1.msra.mxu0 0.0
    %366 = vmatprep.subr.mxu0 0.0
    %367 = vmatpush1.msra.mxu0 0.0
    %368 = vmatprep.subr.mxu0 0.0
    %369 = vmatpush1.msra.mxu0 0.0
    %370 = vmatprep.subr.mxu0 0.0
    %371 = vmatpush1.msra.mxu0 0.0
    %372 = vmatprep.subr.mxu0 0.0
    %373 = vmatpush1.msra.mxu0 0.0
    %374 = vmatprep.subr.mxu0 0.0
    %375 = vmatpush1.msra.mxu0 0.0
    %376 = vmatprep.subr.mxu0 0.0
    %377 = vmatpush1.msra.mxu0 0.0
    %378 = vmatprep.subr.mxu0 0.0
    %379 = vmatpush1.msra.mxu0 0.0
    %380 = vmatprep.subr.mxu0 0.0
    %381 = vmatpush1.msra.mxu0 0.0
    %382 = vmatprep.subr.mxu0 0.0
    %383 = vmatpush1.msra.mxu0 0.0
    %384 = vmatprep.subr.mxu0 0.0
    %385 = vmatpush1.msra.mxu0 %v352
    %386 = vmatprep.subr.mxu0 0.0
    %387 = vmatpush2.msra.mxu0 0.0
    %388 = vmatprep.subr.mxu0 0.0
    %389 = vmatpush2.msra.mxu0 0.0
    %390 = vmatprep.subr.mxu0 0.0
    %391 = vmatpush2.msra.mxu0 0.0
    %392 = vmatprep.subr.mxu0 0.0
    %393 = vmatpush2.msra.mxu0 0.0
    %394 = vmatprep.subr.mxu0 0.0
    %395 = vmatpush2.msra.mxu0 0.0
    %396 = vmatprep.subr.mxu0 0.0
    %397 = vmatpush2.msra.mxu0 0.0
    %398 = vmatprep.subr.mxu0 0.0
    %399 = vmatpush2.msra.mxu0 0.0
    %400 = vmatprep.subr.mxu0 0.0
    %401 = vmatpush2.msra.mxu0 0.0
    %402 = vmatprep.subr.mxu0 0.0
    %403 = vmatpush2.msra.mxu0 0.0
    %404 = vmatprep.subr.mxu0 0.0
    %405 = vmatpush2.msra.mxu0 0.0
    %406 = vmatprep.subr.mxu0 0.0
    %407 = vmatpush2.msra.mxu0 0.0
    %408 = vmatprep.subr.mxu0 0.0
    %409 = vmatpush2.msra.mxu0 0.0
    %410 = vmatprep.subr.mxu0 0.0
    %411 = vmatpush2.msra.mxu0 0.0
    %412 = vmatprep.subr.mxu0 0.0
    %413 = vmatpush2.msra.mxu0 0.0
    %414 = vmatprep.subr.mxu0 0.0
    %415 = vmatpush2.msra.mxu0 0.0
    %416 = vmatprep.subr.mxu0 0.0
    %417 = vmatpush2.msra.mxu0 0.0
    %418 = vmatprep.mubr.f32.mxu0 0.0
    %419 = vmatmul.mubr.f32.gmra.mxu0 %v350
    %v420 = vpop.f32.mrf.mxu0
    %v421 = vadd.f32 %v346, %v420
    %v422 = vpop.f32.mrf.mxu0
    %423 = vdwg.mxu0
    %v424 = vld [vmem:[%s178] sm:$0xff]
    %425 = vrot.lane.b32.xlu0 %v268, 126
    %v426 = vpop.permute.xlu0 %425
    %v428 = vsel %vm26, %v424, 0
    %v430 = vsel %vm30, %v426, 0
    %432 = vmatprep.subr.mxu0 0.0
    %433 = vmatpush1.msra.mxu0 0.0
    %434 = vmatprep.subr.mxu0 0.0
    %435 = vmatpush1.msra.mxu0 0.0
    %436 = vmatprep.subr.mxu0 0.0
    %437 = vmatpush1.msra.mxu0 0.0
    %438 = vmatprep.subr.mxu0 0.0
    %439 = vmatpush1.msra.mxu0 0.0
    %440 = vmatprep.subr.mxu0 0.0
    %441 = vmatpush1.msra.mxu0 0.0
    %442 = vmatprep.subr.mxu0 0.0
    %443 = vmatpush1.msra.mxu0 0.0
    %444 = vmatprep.subr.mxu0 0.0
    %445 = vmatpush1.msra.mxu0 0.0
    %446 = vmatprep.subr.mxu0 0.0
    %447 = vmatpush1.msra.mxu0 0.0
    %448 = vmatprep.subr.mxu0 0.0
    %449 = vmatpush1.msra.mxu0 0.0
    %450 = vmatprep.subr.mxu0 0.0
    %451 = vmatpush1.msra.mxu0 0.0
    %452 = vmatprep.subr.mxu0 0.0
    %453 = vmatpush1.msra.mxu0 0.0
    %454 = vmatprep.subr.mxu0 0.0
    %455 = vmatpush1.msra.mxu0 0.0
    %456 = vmatprep.subr.mxu0 0.0
    %457 = vmatpush1.msra.mxu0 0.0
    %458 = vmatprep.subr.mxu0 0.0
    %459 = vmatpush1.msra.mxu0 0.0
    %460 = vmatprep.subr.mxu0 0.0
    %461 = vmatpush1.msra.mxu0 0.0
    %462 = vmatprep.subr.mxu0 0.0
    %463 = vmatpush1.msra.mxu0 %v430
    %464 = vmatprep.subr.mxu0 0.0
    %465 = vmatpush2.msra.mxu0 0.0
    %466 = vmatprep.subr.mxu0 0.0
    %467 = vmatpush2.msra.mxu0 0.0
    %468 = vmatprep.subr.mxu0 0.0
    %469 = vmatpush2.msra.mxu0 0.0
    %470 = vmatprep.subr.mxu0 0.0
    %471 = vmatpush2.msra.mxu0 0.0
    %472 = vmatprep.subr.mxu0 0.0
    %473 = vmatpush2.msra.mxu0 0.0
    %474 = vmatprep.subr.mxu0 0.0
    %475 = vmatpush2.msra.mxu0 0.0
    %476 = vmatprep.subr.mxu0 0.0
    %477 = vmatpush2.msra.mxu0 0.0
    %478 = vmatprep.subr.mxu0 0.0
    %479 = vmatpush2.msra.mxu0 0.0
    %480 = vmatprep.subr.mxu0 0.0
    %481 = vmatpush2.msra.mxu0 0.0
    %482 = vmatprep.subr.mxu0 0.0
    %483 = vmatpush2.msra.mxu0 0.0
    %484 = vmatprep.subr.mxu0 0.0
    %485 = vmatpush2.msra.mxu0 0.0
    %486 = vmatprep.subr.mxu0 0.0
    %487 = vmatpush2.msra.mxu0 0.0
    %488 = vmatprep.subr.mxu0 0.0
    %489 = vmatpush2.msra.mxu0 0.0
    %490 = vmatprep.subr.mxu0 0.0
    %491 = vmatpush2.msra.mxu0 0.0
    %492 = vmatprep.subr.mxu0 0.0
    %493 = vmatpush2.msra.mxu0 0.0
    %494 = vmatprep.subr.mxu0 0.0
    %495 = vmatpush2.msra.mxu0 0.0
    %496 = vmatprep.mubr.f32.mxu0 0.0
    %497 = vmatmul.mubr.f32.gmra.mxu0 %v428
    %v498 = vpop.f32.mrf.mxu0
    %v499 = vadd.f32 0.0, %v498
    %v500 = vpop.f32.mrf.mxu0
    %501 = vdwg.mxu0
    %v502 = vadd.f32 %v421, %v499
    %v503 = vadd.f32 %v502, %v261
    %v504 = vmax.f32 %v503, 0.0
    %s505 = scalar_lea.vmem [#allocation2], 8
    %506 = vst.msk [vmem:[%s505] sm:$0xff] %vm265, %v504
    // Predicated region
    $region18: #{tpu_custom_call.1} parent=1 // pred_check
      _
    $region19: #{tpu_custom_call.1} parent=1 // pred_check_branch
      %508 = sbr.rel (0) target = $region21
    $region20: #{tpu_custom_call.1} parent=1 // pred_region
      %s510 = ssub.s32 256, 256
      %511 = vsyncadd [#allocation3], %s510
      %s512 = sshll.u32 [#allocation2], 4
      %s513 = int_to_ptr.vmem [resolvable:$true] %s512
      %518 = dma.vmem_to_hbm [thread:$0]  %s513, 256, %s4, [#allocation3], 128, 128, 8
    $region21: #{tpu_custom_call.1} parent=1 // pred_fallthru
      _
    // Predicated region
    $region22: #{tpu_custom_call.1} parent=1 // pred_check
      _
    $region23: #{tpu_custom_call.1} parent=1 // pred_check_branch
      %520 = sbr.rel (0) target = $region25
    $region24: #{tpu_custom_call.1} parent=1 // pred_region
      %521 = dma.done [#allocation3], 256
    $region25: #{tpu_custom_call.1} parent=1 // pred_fallthru
      _
    %522 = vsyncpa [#allocation3], 1

</llo_original>
